<compile_context>
chip_gen: v7x
topology: tpu7x:2x2x1
jax: 0.10.0
libtpu: 0.0.40
codegen_flags: <defaults>
</compile_context>

<pallas_src>
import jax
import jax.numpy as jnp
from jax.experimental import pallas as pl
from jax.experimental.pallas import tpu as pltpu


def flipped_kernel(x_ref, w1_ref, b1_ref, w2_ref, b2_ref, o_ref):
    # Encoder: Linear + ReLU. Cast the f32 input tile to bf16 in VMEM (saves a
    # separate XLA cast pass over HBM); accumulate in f32 on the MXU.
    x = x_ref[...].astype(jnp.bfloat16)
    h = jnp.dot(x, w1_ref[...], preferred_element_type=jnp.float32)
    h = jnp.maximum(h + b1_ref[...], 0.0)

    # Decoder: Linear + Softmax(dim=-1). bf16 MXU operands, f32 accumulate.
    y = jnp.dot(h.astype(jnp.bfloat16), w2_ref[...],
                preferred_element_type=jnp.float32)
    y = y + b2_ref[...]

    # Numerically-stable softmax over the last (lane) axis, all in f32.
    # Exact divide (not approx reciprocal) so rows sum to 1.0 exactly-ish.
    y_max = jnp.max(y, axis=-1, keepdims=True)
    e = jnp.exp(y - y_max)
    denom = jnp.sum(e, axis=-1, keepdims=True)
    o_ref[...] = (e / denom).astype(o_ref.dtype)


def _pick_batch_tile(B, tb):
    """Pick the batch tile: as large as requested, but keep >= 2 grid steps
    when the batch allows (v7x megacore split + DMA/compute overlap), and a
    multiple of 8 sublanes."""
    if B >= 16:
        tb = min(tb, (B + 1) // 2)   # guarantee >= 2 grid steps
    tb = min(tb, max(B, 8))
    tb = max(8, ((tb + 7) // 8) * 8)
    return tb


def flipped_forward(x, w1, b1, w2, b2, *, tb=512, out_dtype=jnp.float32):
    """x: (B, original_dim) f32.  w1: (original_dim, encoding_dim),
    w2: (encoding_dim, original_dim) -- stored pre-transposed as (in, out).
    Set out_dtype=jnp.bfloat16 if downstream permits (halves output HBM)."""
    B, original_dim = x.shape
    encoding_dim = w1.shape[1]

    # x stays f32 into the kernel (bf16 cast happens per-tile in VMEM).
    x = x.astype(jnp.float32)
    w1 = w1.astype(jnp.bfloat16)
    w2 = w2.astype(jnp.bfloat16)
    b1 = jnp.asarray(b1, jnp.float32).reshape(1, encoding_dim)
    b2 = jnp.asarray(b2, jnp.float32).reshape(1, original_dim)

    # --- batch tiling ---
    tb_eff = _pick_batch_tile(B, tb)
    n_tiles = pl.cdiv(B, tb_eff)
    B_pad = n_tiles * tb_eff
    if B_pad != B:
        # Fallback only for ragged batches; pads < tb_eff rows. Padded rows go
        # through a per-row softmax (no cross-row coupling) and are sliced off.
        x = jnp.pad(x, ((0, B_pad - B), (0, 0)))

    # --- VMEM budget (explicit so bigger tiles / dims keep compiling) ---
    itemsize_out = jnp.dtype(out_dtype).itemsize
    x_tile_bytes = tb_eff * original_dim * 4
    o_tile_bytes = tb_eff * original_dim * itemsize_out
    w_bytes = (original_dim * encoding_dim + encoding_dim * original_dim) * 2
    b_bytes = (encoding_dim + original_dim) * 4
    # x/out double-buffered, weights single-buffered, + f32 intermediates.
    vmem_need = 2 * (x_tile_bytes + o_tile_bytes) + w_bytes + b_bytes
    vmem_need += tb_eff * (encoding_dim + 2 * original_dim) * 4
    vmem_limit_bytes = int(min(max(vmem_need + (8 << 20), 32 << 20), 48 << 20))

    # --- advisory cost estimate for the XLA scheduler ---
    cost = pl.CostEstimate(
        flops=2 * B_pad * (original_dim * encoding_dim
                           + encoding_dim * original_dim),
        transcendentals=B_pad * original_dim,                 # softmax exp
        bytes_accessed=int(B_pad * original_dim * 4           # x in (f32)
                           + w_bytes + b_bytes                # weights/biases
                           + B_pad * original_dim * itemsize_out),  # out
    )

    # Resident operands: constant index_map + single buffering (no 2x copy).
    def resident(shape):
        return pl.BlockSpec(shape, lambda i: (0, 0),
                            pipeline_mode=pl.Buffered(1))

    out = pl.pallas_call(
        flipped_kernel,
        out_shape=jax.ShapeDtypeStruct((B_pad, original_dim), out_dtype),
        grid=(n_tiles,),
        in_specs=[
            pl.BlockSpec((tb_eff, original_dim), lambda i: (i, 0)),  # x tile
            resident((original_dim, encoding_dim)),                  # w1
            resident((1, encoding_dim)),                             # b1
            resident((encoding_dim, original_dim)),                  # w2
            resident((1, original_dim)),                             # b2
        ],
        out_specs=pl.BlockSpec((tb_eff, original_dim), lambda i: (i, 0)),
        compiler_params=pltpu.CompilerParams(
            # Batch axis is embarrassingly parallel -> v7x megacore split;
            # harmless on v5e/v6e.
            dimension_semantics=("parallel",),
            vmem_limit_bytes=vmem_limit_bytes,
        ),
        cost_estimate=cost,
    )(x, w1, b1, w2, b2)

    return out[:B] if B_pad != B else out


def init_params(key, original_dim, encoding_dim):
    # Mimic nn.Linear uniform(-1/sqrt(fan_in), 1/sqrt(fan_in)); weights are
    # stored pre-transposed as (in, out) so the kernel does x @ W directly.
    k1, k2, k3, k4 = jax.random.split(key, 4)
    bound1 = 1.0 / jnp.sqrt(original_dim)
    bound2 = 1.0 / jnp.sqrt(encoding_dim)
    w1 = jax.random.uniform(k1, (original_dim, encoding_dim), jnp.float32,
                            -bound1, bound1)
    b1 = jax.random.uniform(k2, (1, encoding_dim), jnp.float32, -bound1, bound1)
    w2 = jax.random.uniform(k3, (encoding_dim, original_dim), jnp.float32,
                            -bound2, bound2)
    b2 = jax.random.uniform(k4, (1, original_dim), jnp.float32, -bound2, bound2)
    return w1, b1, w2, b2


if __name__ == "__main__":
    # Small shapes; B is deliberately not a multiple of 8 so the adaptive tile
    # (2 grid steps here) and the pad-and-slice fallback are both exercised.
    B = 200
    original_dim = 256     # multiple of 128 -> lane-dense output stores
    encoding_dim = 128

    key = jax.random.PRNGKey(0)
    kx, kp = jax.random.split(key)
    x = jax.random.normal(kx, (B, original_dim), jnp.float32)
    w1, b1, w2, b2 = init_params(kp, original_dim, encoding_dim)

    out = flipped_forward(x, w1, b1, w2, b2)   # tb=512 clamps to 2 grid steps
    jax.block_until_ready(out)

    # Reference mirroring the kernel's precision contract: bf16 MXU operands
    # (x, w1, h, w2), f32 accumulation / bias / ReLU / softmax.
    xf = x.astype(jnp.bfloat16).astype(jnp.float32)
    w1f = w1.astype(jnp.bfloat16).astype(jnp.float32)
    w2f = w2.astype(jnp.bfloat16).astype(jnp.float32)
    h_ref = jnp.maximum(xf @ w1f + b1, 0.0)
    h_ref = h_ref.astype(jnp.bfloat16).astype(jnp.float32)
    y_ref = jax.nn.softmax(h_ref @ w2f + b2, axis=-1)

    assert out.shape == (B, original_dim)
    assert out.dtype == jnp.float32
    assert jnp.allclose(out, y_ref, atol=2e-3, rtol=2e-2)
    # Exact divide in the kernel -> softmax rows sum to 1 to f32 precision.
    assert jnp.allclose(jnp.sum(out, axis=-1), 1.0, atol=1e-4)

    print("KERNEL_OK")
</pallas_src>

<mosaic_0001>
module attributes {stable_mosaic.version = 11 : i64} {
  func.func @flipped_kernel(%arg0: i32, %arg1: memref<104x256xf32, #tpu.memory_space<vmem>>, %arg2: memref<256x128xbf16, #tpu.memory_space<vmem>>, %arg3: memref<1x128xf32, #tpu.memory_space<vmem>>, %arg4: memref<128x256xbf16, #tpu.memory_space<vmem>>, %arg5: memref<1x256xf32, #tpu.memory_space<vmem>>, %arg6: memref<104x256xf32, #tpu.memory_space<vmem>>) attributes {dimension_semantics = [#tpu.dimension_semantics<parallel>], iteration_bounds = array<i64: 2>, scalar_prefetch = 0 : i64, scratch_operands = 0 : i64, tpu.core_type = #tpu.core_type<tc>, window_params = [{transform_indices = @transform_0, window_bounds = array<i64: 104, 256>}, {pipeline_mode = #tpu.pipeline_mode<synchronous>, transform_indices = @transform_1, window_bounds = array<i64: 256, 128>}, {pipeline_mode = #tpu.pipeline_mode<synchronous>, transform_indices = @transform_2, window_bounds = array<i64: 1, 128>}, {pipeline_mode = #tpu.pipeline_mode<synchronous>, transform_indices = @transform_3, window_bounds = array<i64: 128, 256>}, {pipeline_mode = #tpu.pipeline_mode<synchronous>, transform_indices = @transform_4, window_bounds = array<i64: 1, 256>}, {transform_indices = @transform_5, window_bounds = array<i64: 104, 256>}]} {
    %c0 = arith.constant 0 : index
    %c0_0 = arith.constant 0 : index
    %0 = vector.load %arg1[%c0, %c0_0] : memref<104x256xf32, #tpu.memory_space<vmem>>, vector<104x256xf32>
    %1 = arith.truncf %0 : vector<104x256xf32> to vector<104x256xbf16>
    %c0_1 = arith.constant 0 : index
    %c0_2 = arith.constant 0 : index
    %2 = vector.load %arg2[%c0_1, %c0_2] : memref<256x128xbf16, #tpu.memory_space<vmem>>, vector<256x128xbf16>
    %cst = arith.constant dense<0.000000e+00> : vector<104x128xf32>
    %3 = tpu.matmul %1, %2, %cst {dimension_numbers = #tpu.dot_dimension_numbers<[1], [0], [0], [1], [0, 0, 1, 1], [], []>} : vector<104x256xbf16>, vector<256x128xbf16>, vector<104x128xf32> -> vector<104x128xf32>
    %c0_3 = arith.constant 0 : index
    %c0_4 = arith.constant 0 : index
    %4 = vector.load %arg3[%c0_3, %c0_4] : memref<1x128xf32, #tpu.memory_space<vmem>>, vector<1x128xf32>
    %5 = vector.broadcast %4 : vector<1x128xf32> to vector<104x128xf32>
    %6 = arith.addf %3, %5 : vector<104x128xf32>
    %cst_5 = arith.constant 0.000000e+00 : f32
    %7 = vector.broadcast %cst_5 : f32 to vector<104x128xf32>
    %8 = arith.maximumf %6, %7 : vector<104x128xf32>
    %9 = arith.truncf %8 : vector<104x128xf32> to vector<104x128xbf16>
    %c0_6 = arith.constant 0 : index
    %c0_7 = arith.constant 0 : index
    %10 = vector.load %arg4[%c0_6, %c0_7] : memref<128x256xbf16, #tpu.memory_space<vmem>>, vector<128x256xbf16>
    %cst_8 = arith.constant dense<0.000000e+00> : vector<104x256xf32>
    %11 = tpu.matmul %9, %10, %cst_8 {dimension_numbers = #tpu.dot_dimension_numbers<[1], [0], [0], [1], [0, 0, 1, 1], [], []>} : vector<104x128xbf16>, vector<128x256xbf16>, vector<104x256xf32> -> vector<104x256xf32>
    %c0_9 = arith.constant 0 : index
    %c0_10 = arith.constant 0 : index
    %12 = vector.load %arg5[%c0_9, %c0_10] : memref<1x256xf32, #tpu.memory_space<vmem>>, vector<1x256xf32>
    %13 = vector.broadcast %12 : vector<1x256xf32> to vector<104x256xf32>
    %14 = arith.addf %11, %13 : vector<104x256xf32>
    %cst_11 = arith.constant dense<0xFF800000> : vector<104xf32>
    %15 = vector.multi_reduction <maximumf>, %14, %cst_11 [1] : vector<104x256xf32> to vector<104xf32>
    %16 = vector.shape_cast %15 : vector<104xf32> to vector<104x1xf32>
    %17 = vector.broadcast %16 : vector<104x1xf32> to vector<104x256xf32>
    %18 = arith.subf %14, %17 : vector<104x256xf32>
    %19 = math.exp %18 : vector<104x256xf32>
    %cst_12 = arith.constant dense<0.000000e+00> : vector<104xf32>
    %20 = vector.multi_reduction <add>, %19, %cst_12 [1] : vector<104x256xf32> to vector<104xf32>
    %21 = vector.shape_cast %20 : vector<104xf32> to vector<104x1xf32>
    %22 = vector.broadcast %21 : vector<104x1xf32> to vector<104x256xf32>
    %23 = arith.divf %19, %22 : vector<104x256xf32>
    %c0_13 = arith.constant 0 : index
    %c0_14 = arith.constant 0 : index
    %24 = vector.load %arg6[%c0_13, %c0_14] : memref<104x256xf32, #tpu.memory_space<vmem>>, vector<104x256xf32>
    tpu.vector_store %arg6[%c0_13, %c0_14], %23 {strides = array<i32>} : memref<104x256xf32, #tpu.memory_space<vmem>>, vector<104x256xf32>,
    return
  }
  func.func @transform_0(%arg0: i32) -> (i32, i32) {
    %c0_i32 = arith.constant 0 : i32
    %c0_i32_0 = arith.constant 0 : i32
    return %arg0, %c0_i32 : i32, i32
  }
  func.func @transform_1(%arg0: i32) -> (i32, i32) {
    %c0_i32 = arith.constant 0 : i32
    %c0_i32_0 = arith.constant 0 : i32
    %c0_i32_1 = arith.constant 0 : i32
    return %c0_i32, %c0_i32_0 : i32, i32
  }
  func.func @transform_2(%arg0: i32) -> (i32, i32) {
    %c0_i32 = arith.constant 0 : i32
    %c0_i32_0 = arith.constant 0 : i32
    %c0_i32_1 = arith.constant 0 : i32
    return %c0_i32, %c0_i32_0 : i32, i32
  }
  func.func @transform_3(%arg0: i32) -> (i32, i32) {
    %c0_i32 = arith.constant 0 : i32
    %c0_i32_0 = arith.constant 0 : i32
    %c0_i32_1 = arith.constant 0 : i32
    return %c0_i32, %c0_i32_0 : i32, i32
  }
  func.func @transform_4(%arg0: i32) -> (i32, i32) {
    %c0_i32 = arith.constant 0 : i32
    %c0_i32_0 = arith.constant 0 : i32
    %c0_i32_1 = arith.constant 0 : i32
    return %c0_i32, %c0_i32_0 : i32, i32
  }
  func.func @transform_5(%arg0: i32) -> (i32, i32) {
    %c0_i32 = arith.constant 0 : i32
    %c0_i32_0 = arith.constant 0 : i32
    return %arg0, %c0_i32 : i32, i32
  }
}

</mosaic_0001>

<llo_original>
// kernel: tpu_custom_call.1
$region0: #{tpu_custom_call.1}
  #allocation0 [shape = 'u32[]', space=smem, size = 0x4, offset = 0x4, fixed_abs, tag = 'smem constant byte address 0x4 - core index']
  #allocation1 [shape = 'u32[144,128]{1,0:T(1,128)}', space=vmem, size = 0x12000, scoped, tag = 'internal scratch']
  %s0 = inlined_call_operand.hbm [shape: f32[208,256], index: 0, kind: input, shape index: {}]
  %s1 = inlined_call_operand.hbm [shape: bf16[256,128], index: 1, kind: input, shape index: {}]
  %s2 = inlined_call_operand.vmem [shape: f32[1,128], index: 2, kind: input, shape index: {}]
  %s3 = inlined_call_operand.hbm [shape: bf16[128,256], index: 3, kind: input, shape index: {}]
  %s4 = inlined_call_operand.vmem [shape: f32[1,256], index: 4, kind: input, shape index: {}]
  %s5 = inlined_call_operand.hbm [shape: f32[208,256], index: 5, kind: output, shape index: {}]
  %s6 = sld [smem:[#allocation0]]
  $region65: #{tpu_custom_call.1} parent=0
    _
  %s8 = ssub.s32 1, %s6
  %s9 = scalar_select 0, %s8, %s6
  $region1: #{tpu_custom_call.1} parent=0
    #allocation2 [shape = 'u8[212992]{0}', space=vmem, size = 0x34000, scoped, tag = 'input window, operand 0']
    #allocation3 [shape = 's32[2]{0}', space=sflag, size = 0x8, scoped, tag = 'scoped memory for tpu_custom_call.1']
    #allocation4 [shape = 's32[2]{0}', space=sflag, size = 0x8, scoped, tag = 'scoped memory for tpu_custom_call.1']
    #allocation5 [shape = 'u8[65536]{0}', space=vmem, size = 0x10000, scoped, tag = 'input window, operand 1, single buffered']
    #allocation6 [shape = 's32[1]{0}', space=sflag, size = 0x4, scoped, tag = 'scoped memory for tpu_custom_call.1']
    #allocation7 [shape = 'u8[65536]{0}', space=vmem, size = 0x10000, scoped, tag = 'input window, operand 3, single buffered']
    #allocation8 [shape = 'u8[212992]{0}', space=vmem, size = 0x34000, scoped, tag = 'output window, operand 0']
    %10 = vsyncpa [#allocation3], 0
    %s11 = scalar_lea.sflag [#allocation3], 1
    %12 = vsyncpa %s11, 0
    %13 = vsyncpa [#allocation6], 0
    %14 = vsyncpa [#allocation4], 0
    %s15 = scalar_lea.sflag [#allocation4], 1
    %16 = vsyncpa %s15, 0
    loop: start=0, step=1, limit=4
    $region2: #{tpu_custom_call.1} parent=1 // loop_pre_header
      _
    $region3: #{tpu_custom_call.1} parent=1 // loop_header
      %s18 = sphi 0, %s22
      %p19 = scmp.ge.s32.totalorder %s18, 4
      %s28 = sphi 0, %s30
      %s31 = sphi 0, %s28
      %s32 = sphi 0, %s31
      %s48 = sphi 0, %s32
      %s52 = sphi 0, %s52
      %s54 = sphi 0, %s52
      %s55 = sphi 0, %s54
      %s69 = sphi 0, %s55
      %s73 = sphi 0, %s73
      %s75 = sphi 0, %s73
      %s76 = sphi 0, %s75
      %s90 = sphi 0, %s76
      %s94 = sphi 0, %s94
      %s96 = sphi 0, %s94
      %s97 = sphi 0, %s96
      %s111 = sphi 0, %s97
      %s115 = sphi 0, %s115
      %s117 = sphi 0, %s115
      %s118 = sphi 0, %s117
      %s132 = sphi 0, %s118
      %s138 = sphi 0, %s140
      %s141 = sphi 0, %s138
      %s142 = sphi 0, %s141
      %s158 = sphi 0, %s142
    $region4: #{tpu_custom_call.1} parent=1 // loop_header_branch
      %21 = sbr.rel (%p19) target = $region8
    $region5: #{tpu_custom_call.1} parent=1 // loop_body
      %s23 = ssub.s32 %s18, 1
      %s24 = ssub.s32 %s18, 2
      %s25 = sadd.s32 %s18, 1
      %s26 = ssub.s32 %s18, %s25
      %p27 = scmp.eq.s32.totalorder %s26, 0
      %s29 = sadd.s32 %s28, 1
      %s30 = scalar_select %p27, %s28, %s29
      %p33 = pneg %p27
      %p34 = scmp.eq.s32.totalorder %s18, 1
      %p35 = por %p33, %p34
      %p36 = scmp.ne.s32.totalorder %s28, %s31
      %p37 = scmp.eq.s32.totalorder %s18, 0
      %p38 = por %p36, %p37
      %p39 = scmp.ne.s32.totalorder %s28, %s31
      %p40 = scmp.eq.s32.totalorder %s23, 1
      %p41 = por %p39, %p40
      %p42 = scmp.ne.s32.totalorder %s31, %s32
      %p43 = scmp.eq.s32.totalorder %s23, 0
      %p44 = por %p42, %p43
      %p45 = scmp.ne.s32.totalorder %s31, %s32
      %p46 = scmp.eq.s32.totalorder %s24, 1
      %p47 = por %p45, %p46
      %p49 = scmp.ne.s32.totalorder %s32, %s48
      %p50 = scmp.eq.s32.totalorder %s24, 0
      %p51 = por %p49, %p50
      %s53 = sadd.s32 %s52, 1
      %p56 = scmp.eq.s32.totalorder %s18, 1
      %p57 = scmp.ne.s32.totalorder %s52, %s54
      %p58 = scmp.eq.s32.totalorder %s18, 0
      %p59 = por %p57, %p58
      %p60 = scmp.ne.s32.totalorder %s52, %s54
      %p61 = scmp.eq.s32.totalorder %s23, 1
      %p62 = por %p60, %p61
      %p63 = scmp.ne.s32.totalorder %s54, %s55
      %p64 = scmp.eq.s32.totalorder %s23, 0
      %p65 = por %p63, %p64
      %p66 = scmp.ne.s32.totalorder %s54, %s55
      %p67 = scmp.eq.s32.totalorder %s24, 1
      %p68 = por %p66, %p67
      %p70 = scmp.ne.s32.totalorder %s55, %s69
      %p71 = scmp.eq.s32.totalorder %s24, 0
      %p72 = por %p70, %p71
      %s74 = sadd.s32 %s73, 1
      %p77 = scmp.eq.s32.totalorder %s18, 1
      %p78 = scmp.ne.s32.totalorder %s73, %s75
      %p79 = scmp.eq.s32.totalorder %s18, 0
      %p80 = por %p78, %p79
      %p81 = scmp.ne.s32.totalorder %s73, %s75
      %p82 = scmp.eq.s32.totalorder %s23, 1
      %p83 = por %p81, %p82
      %p84 = scmp.ne.s32.totalorder %s75, %s76
      %p85 = scmp.eq.s32.totalorder %s23, 0
      %p86 = por %p84, %p85
      %p87 = scmp.ne.s32.totalorder %s75, %s76
      %p88 = scmp.eq.s32.totalorder %s24, 1
      %p89 = por %p87, %p88
      %p91 = scmp.ne.s32.totalorder %s76, %s90
      %p92 = scmp.eq.s32.totalorder %s24, 0
      %p93 = por %p91, %p92
      %s95 = sadd.s32 %s94, 1
      %p98 = scmp.eq.s32.totalorder %s18, 1
      %p99 = scmp.ne.s32.totalorder %s94, %s96
      %p100 = scmp.eq.s32.totalorder %s18, 0
      %p101 = por %p99, %p100
      %p102 = scmp.ne.s32.totalorder %s94, %s96
      %p103 = scmp.eq.s32.totalorder %s23, 1
      %p104 = por %p102, %p103
      %p105 = scmp.ne.s32.totalorder %s96, %s97
      %p106 = scmp.eq.s32.totalorder %s23, 0
      %p107 = por %p105, %p106
      %p108 = scmp.ne.s32.totalorder %s96, %s97
      %p109 = scmp.eq.s32.totalorder %s24, 1
      %p110 = por %p108, %p109
      %p112 = scmp.ne.s32.totalorder %s97, %s111
      %p113 = scmp.eq.s32.totalorder %s24, 0
      %p114 = por %p112, %p113
      %s116 = sadd.s32 %s115, 1
      %p119 = scmp.eq.s32.totalorder %s18, 1
      %p120 = scmp.ne.s32.totalorder %s115, %s117
      %p121 = scmp.eq.s32.totalorder %s18, 0
      %p122 = por %p120, %p121
      %p123 = scmp.ne.s32.totalorder %s115, %s117
      %p124 = scmp.eq.s32.totalorder %s23, 1
      %p125 = por %p123, %p124
      %p126 = scmp.ne.s32.totalorder %s117, %s118
      %p127 = scmp.eq.s32.totalorder %s23, 0
      %p128 = por %p126, %p127
      %p129 = scmp.ne.s32.totalorder %s117, %s118
      %p130 = scmp.eq.s32.totalorder %s24, 1
      %p131 = por %p129, %p130
      %p133 = scmp.ne.s32.totalorder %s118, %s132
      %p134 = scmp.eq.s32.totalorder %s24, 0
      %p135 = por %p133, %p134
      %s136 = ssub.s32 %s18, %s25
      %p137 = scmp.eq.s32.totalorder %s136, 0
      %s139 = sadd.s32 %s138, 1
      %s140 = scalar_select %p137, %s138, %s139
      %p143 = pneg %p137
      %p144 = scmp.eq.s32.totalorder %s18, 1
      %p145 = por %p143, %p144
      %p146 = scmp.ne.s32.totalorder %s138, %s141
      %p147 = scmp.eq.s32.totalorder %s18, 0
      %p148 = por %p146, %p147
      %p149 = scmp.ne.s32.totalorder %s138, %s141
      %p150 = scmp.eq.s32.totalorder %s23, 1
      %p151 = por %p149, %p150
      %p152 = scmp.ne.s32.totalorder %s141, %s142
      %p153 = scmp.eq.s32.totalorder %s23, 0
      %p154 = por %p152, %p153
      %p155 = scmp.ne.s32.totalorder %s141, %s142
      %p156 = scmp.eq.s32.totalorder %s24, 1
      %p157 = por %p155, %p156
      %p159 = scmp.ne.s32.totalorder %s142, %s158
      %p160 = scmp.eq.s32.totalorder %s24, 0
      %p161 = por %p159, %p160
      %p162 = scmp.le.s32.totalorder 1, %s18
      %p163 = scmp.lt.s32.totalorder %s18, 3
      %p164 = pnand %p162, %p163
      %p165 = pneg %p164
      // Predicated region
      $region9: #{tpu_custom_call.1} parent=5 // pred_check
        _
      $region10: #{tpu_custom_call.1} parent=5 // pred_check_branch
        %167 = sbr.rel (%p164) target = $region12
      $region11: #{tpu_custom_call.1} parent=5 // pred_region
        %s168 = ssub.s32 %s18, 1
        // Predicated region
        $region13: #{tpu_custom_call.1} parent=11 // pred_check
          %p169 = pneg %p65
        $region14: #{tpu_custom_call.1} parent=11 // pred_check_branch
          %171 = sbr.rel (%p169) target = $region16
        $region15: #{tpu_custom_call.1} parent=11 // pred_region
          %s173 = ssub.s32 2048, 2048
          %174 = vsyncadd [#allocation6], %s173
          %s175 = sshll.u32 [#allocation5], 4
          %s176 = int_to_ptr.vmem [resolvable:$true] %s175
          %181 = dma.hbm_to_vmem [thread:$0]  %s1, 2048, %s176, [#allocation6], 64, 64, 4
        $region16: #{tpu_custom_call.1} parent=11 // pred_fallthru
          _
        // Predicated region
        $region17: #{tpu_custom_call.1} parent=11 // pred_check
          %p182 = pneg %p86
        $region18: #{tpu_custom_call.1} parent=11 // pred_check_branch
          %184 = sbr.rel (%p182) target = $region20
        $region19: #{tpu_custom_call.1} parent=11 // pred_region
          _
        $region20: #{tpu_custom_call.1} parent=11 // pred_fallthru
          _
        // Predicated region
        $region21: #{tpu_custom_call.1} parent=11 // pred_check
          %p185 = pneg %p107
        $region22: #{tpu_custom_call.1} parent=11 // pred_check_branch
          %187 = sbr.rel (%p185) target = $region24
        $region23: #{tpu_custom_call.1} parent=11 // pred_region
          %s189 = ssub.s32 2048, 2048
          %190 = vsyncadd [#allocation6], %s189
          %s191 = sshll.u32 [#allocation7], 4
          %s192 = int_to_ptr.vmem [resolvable:$true] %s191
          %197 = dma.hbm_to_vmem [thread:$0]  %s3, 2048, %s192, [#allocation6], 128, 128, 8
        $region24: #{tpu_custom_call.1} parent=11 // pred_fallthru
          _
        // Predicated region
        $region25: #{tpu_custom_call.1} parent=11 // pred_check
          %p198 = pneg %p128
        $region26: #{tpu_custom_call.1} parent=11 // pred_check_branch
          %200 = sbr.rel (%p198) target = $region28
        $region27: #{tpu_custom_call.1} parent=11 // pred_region
          _
        $region28: #{tpu_custom_call.1} parent=11 // pred_fallthru
          _
      $region12: #{tpu_custom_call.1} parent=5 // pred_fallthru
        _
      %p201 = scmp.lt.s32.totalorder %s18, 2
      // Predicated region
      $region29: #{tpu_custom_call.1} parent=5 // pred_check
        %p202 = pneg %p201
      $region30: #{tpu_custom_call.1} parent=5 // pred_check_branch
        %204 = sbr.rel (%p202) target = $region32
      $region31: #{tpu_custom_call.1} parent=5 // pred_region
        // Predicated region
        $region33: #{tpu_custom_call.1} parent=31 // pred_check
          %p205 = pneg %p38
        $region34: #{tpu_custom_call.1} parent=31 // pred_check_branch
          %207 = sbr.rel (%p205) target = $region36
        $region35: #{tpu_custom_call.1} parent=31 // pred_region
          %s208 = sand.u32 %s28, 1
          %s209 = scalar_lea.sflag [#allocation3], %s208
          %s210 = sand.u32 %s28, 1
          %s211 = smul.addr %s210, 208
          %s212 = scalar_lea.vmem [#allocation2], %s211
          %s213 = smul.u32 13, %s18
          %s215 = ssub.s32 3328, 3328
          %216 = vsyncadd %s209, %s215
          %s217 = smul.addr %s213, 2
          %s218 = smul.addr %s217, 128
          %s219 = scalar_lea.hbm %s0, %s218
          %s220 = sshll.u32 %s212, 4
          %s221 = int_to_ptr.vmem [resolvable:$true] %s220
          %226 = dma.hbm_to_vmem [thread:$0]  %s219, 3328, %s221, %s209, 256, 256, 16
        $region36: #{tpu_custom_call.1} parent=31 // pred_fallthru
          _
      $region32: #{tpu_custom_call.1} parent=5 // pred_fallthru
        _
      %p227 = scmp.le.s32.totalorder 1, %s18
      %p228 = scmp.lt.s32.totalorder %s18, 3
      %p229 = pnand %p227, %p228
      %p230 = pneg %p229
      // Predicated region
      $region37: #{tpu_custom_call.1} parent=5 // pred_check
        _
      $region38: #{tpu_custom_call.1} parent=5 // pred_check_branch
        %232 = sbr.rel (%p229) target = $region40
      $region39: #{tpu_custom_call.1} parent=5 // pred_region
        %s233 = ssub.s32 %s18, 1
        %s234 = sand.u32 %s31, 1
        %s235 = scalar_lea.sflag [#allocation3], %s234
        %s236 = sand.u32 %s31, 1
        %s237 = smul.addr %s236, 208
        %s238 = scalar_lea.vmem [#allocation2], %s237
        // Predicated region
        $region41: #{tpu_custom_call.1} parent=39 // pred_check
          %p239 = pneg %p44
        $region42: #{tpu_custom_call.1} parent=39 // pred_check_branch
          %241 = sbr.rel (%p239) target = $region44
        $region43: #{tpu_custom_call.1} parent=39 // pred_region
          %242 = dma.done %s235, 3328
        $region44: #{tpu_custom_call.1} parent=39 // pred_fallthru
          _
        // Predicated region
        $region45: #{tpu_custom_call.1} parent=39 // pred_check
          %p243 = pneg %p65
        $region46: #{tpu_custom_call.1} parent=39 // pred_check_branch
          %245 = sbr.rel (%p243) target = $region48
        $region47: #{tpu_custom_call.1} parent=39 // pred_region
          %246 = dma.done [#allocation6], 2048
        $region48: #{tpu_custom_call.1} parent=39 // pred_fallthru
          _
        // Predicated region
        $region49: #{tpu_custom_call.1} parent=39 // pred_check
          %p247 = pneg %p107
        $region50: #{tpu_custom_call.1} parent=39 // pred_check_branch
          %249 = sbr.rel (%p247) target = $region52
        $region51: #{tpu_custom_call.1} parent=39 // pred_region
          %250 = dma.done [#allocation6], 2048
        $region52: #{tpu_custom_call.1} parent=39 // pred_fallthru
          _
        %s251 = sand.u32 %s31, 1
        %s252 = scalar_lea.sflag [#allocation3], %s251
        %s253 = sand.u32 %s31, 1
        %s254 = smul.addr %s253, 208
        %s255 = scalar_lea.vmem [#allocation2], %s254
        %p256 = pneg %p44
        %p257 = pneg %p41
        %p258 = pneg %p65
        %p259 = pneg %p62
        %p260 = pneg %p86
        %p261 = pneg %p83
        %p262 = pneg %p107
        %p263 = pneg %p104
        %p264 = pneg %p128
        %p265 = pneg %p125
        %p266 = pneg %p154
        %p267 = pneg %p151
        %s268 = sand.u32 %s141, 1
        %s269 = scalar_lea.sflag [#allocation4], %s268
        %s270 = sand.u32 %s141, 1
        %s271 = smul.addr %s270, 208
        %s272 = scalar_lea.vmem [#allocation8], %s271
        %s273 = smul.u32 13, %s23
        %s274 = smul.u32 13, %s23
        %v276 = vld [vmem:[%s238] sm:$0xff]
        %v277 = vld [vmem:[%s238 + $0x8] sm:$0xff]
        %v278 = vld [vmem:[%s238 + $0x10] sm:$0xff]
        %v279 = vld [vmem:[%s238 + $0x18] sm:$0xff]
        %v280 = vld [vmem:[%s238 + $0x20] sm:$0xff]
        %v281 = vld [vmem:[%s238 + $0x28] sm:$0xff]
        %v282 = vld [vmem:[%s238 + $0x30] sm:$0xff]
        %v283 = vld [vmem:[%s238 + $0x38] sm:$0xff]
        %v284 = vld [vmem:[%s238 + $0x40] sm:$0xff]
        %v285 = vld [vmem:[%s238 + $0x48] sm:$0xff]
        %v286 = vld [vmem:[%s238 + $0x50] sm:$0xff]
        %v287 = vld [vmem:[%s238 + $0x58] sm:$0xff]
        %v288 = vld [vmem:[%s238 + $0x60] sm:$0xff]
        %v289 = vld [vmem:[%s238 + $0x68] sm:$0xff]
        %v290 = vld [vmem:[%s238 + $0x70] sm:$0xff]
        %v291 = vld [vmem:[%s238 + $0x78] sm:$0xff]
        %v292 = vld [vmem:[%s238 + $0x80] sm:$0xff]
        %v293 = vld [vmem:[%s238 + $0x88] sm:$0xff]
        %v294 = vld [vmem:[%s238 + $0x90] sm:$0xff]
        %v295 = vld [vmem:[%s238 + $0x98] sm:$0xff]
        %v296 = vld [vmem:[%s238 + $0xa0] sm:$0xff]
        %v297 = vld [vmem:[%s238 + $0xa8] sm:$0xff]
        %v298 = vld [vmem:[%s238 + $0xb0] sm:$0xff]
        %v299 = vld [vmem:[%s238 + $0xb8] sm:$0xff]
        %v300 = vld [vmem:[%s238 + $0xc0] sm:$0xff]
        %v301 = vld [vmem:[%s238 + $0xc8] sm:$0xff]
        %v302 = vpack.c.bf16 %v278, %v276
        %v303 = vpack.c.bf16 %v279, %v277
        %v304 = vpack.c.bf16 %v282, %v280
        %v305 = vpack.c.bf16 %v283, %v281
        %v306 = vpack.c.bf16 %v286, %v284
        %v307 = vpack.c.bf16 %v287, %v285
        %v308 = vpack.c.bf16 %v290, %v288
        %v309 = vpack.c.bf16 %v291, %v289
        %v310 = vpack.c.bf16 %v294, %v292
        %v311 = vpack.c.bf16 %v295, %v293
        %v312 = vpack.c.bf16 %v298, %v296
        %v313 = vpack.c.bf16 %v299, %v297
        %v314 = vpack.c.bf16 %v300, %v300
        %v315 = vpack.c.bf16 %v301, %v301
        %v316 = vld [vmem:[#allocation5] sm:$0xf]
        %v317 = vld [vmem:[#allocation5 + $0x4] sm:$0xf]
        %v318 = vld [vmem:[#allocation5 + $0x8] sm:$0xf]
        %v319 = vld [vmem:[#allocation5 + $0xc] sm:$0xf]
        %v320 = vld [vmem:[#allocation5 + $0x10] sm:$0xf]
        %v321 = vld [vmem:[#allocation5 + $0x14] sm:$0xf]
        %v322 = vld [vmem:[#allocation5 + $0x18] sm:$0xf]
        %v323 = vld [vmem:[#allocation5 + $0x1c] sm:$0xf]
        %v324 = vld [vmem:[#allocation5 + $0x20] sm:$0xf]
        %v325 = vld [vmem:[#allocation5 + $0x24] sm:$0xf]
        %v326 = vld [vmem:[#allocation5 + $0x28] sm:$0xf]
        %v327 = vld [vmem:[#allocation5 + $0x2c] sm:$0xf]
        %v328 = vld [vmem:[#allocation5 + $0x30] sm:$0xf]
        %v329 = vld [vmem:[#allocation5 + $0x34] sm:$0xf]
        %v330 = vld [vmem:[#allocation5 + $0x38] sm:$0xf]
        %v331 = vld [vmem:[#allocation5 + $0x3c] sm:$0xf]
        %v332 = vld [vmem:[#allocation5 + $0x40] sm:$0xf]
        %v333 = vld [vmem:[#allocation5 + $0x44] sm:$0xf]
        %v334 = vld [vmem:[#allocation5 + $0x48] sm:$0xf]
        %v335 = vld [vmem:[#allocation5 + $0x4c] sm:$0xf]
        %v336 = vld [vmem:[#allocation5 + $0x50] sm:$0xf]
        %v337 = vld [vmem:[#allocation5 + $0x54] sm:$0xf]
        %v338 = vld [vmem:[#allocation5 + $0x58] sm:$0xf]
        %v339 = vld [vmem:[#allocation5 + $0x5c] sm:$0xf]
        %v340 = vld [vmem:[#allocation5 + $0x60] sm:$0xf]
        %v341 = vld [vmem:[#allocation5 + $0x64] sm:$0xf]
        %v342 = vld [vmem:[#allocation5 + $0x68] sm:$0xf]
        %v343 = vld [vmem:[#allocation5 + $0x6c] sm:$0xf]
        %v344 = vld [vmem:[#allocation5 + $0x70] sm:$0xf]
        %v345 = vld [vmem:[#allocation5 + $0x74] sm:$0xf]
        %v346 = vld [vmem:[#allocation5 + $0x78] sm:$0xf]
        %v347 = vld [vmem:[#allocation5 + $0x7c] sm:$0xf]
        %v348 = vld [vmem:[%s2] sm:$0x1]
        %v350 = vlaneseq
        %v351 = vshrl.u32 %v350, 7
        %v352 = vsub.s32 0, %v351
        %v353 = vrot.slane %v348, %v352
        %v387 = vunpack.c.l.b16 %v316
        %v388 = vunpack.c.l.b16 %v317
        %v389 = vunpack.c.l.b16 %v318
        %v390 = vunpack.c.l.b16 %v319
        %v391 = vunpack.c.l.b16 %v320
        %v392 = vunpack.c.l.b16 %v321
        %v393 = vunpack.c.l.b16 %v322
        %v394 = vunpack.c.l.b16 %v323
        %v395 = vunpack.c.l.b16 %v324
        %v396 = vunpack.c.l.b16 %v325
        %v397 = vunpack.c.l.b16 %v326
        %v398 = vunpack.c.l.b16 %v327
        %v399 = vunpack.c.l.b16 %v328
        %v400 = vunpack.c.l.b16 %v329
        %v401 = vunpack.c.l.b16 %v330
        %v402 = vunpack.c.l.b16 %v331
        %v403 = vunpack.c.l.b16 %v332
        %v404 = vunpack.c.l.b16 %v333
        %v405 = vunpack.c.l.b16 %v334
        %v406 = vunpack.c.l.b16 %v335
        %v407 = vunpack.c.l.b16 %v336
        %v408 = vunpack.c.l.b16 %v337
        %v409 = vunpack.c.l.b16 %v338
        %v410 = vunpack.c.l.b16 %v339
        %v411 = vunpack.c.l.b16 %v340
        %v412 = vunpack.c.l.b16 %v341
        %v413 = vunpack.c.l.b16 %v342
        %v414 = vunpack.c.l.b16 %v343
        %v415 = vunpack.c.l.b16 %v344
        %v416 = vunpack.c.l.b16 %v345
        %v417 = vunpack.c.l.b16 %v346
        %v418 = vunpack.c.l.b16 %v347
        %v419 = vpack.c.b16 %v388, %v387
        %v420 = vpack.c.b16 %v390, %v389
        %v421 = vpack.c.b16 %v392, %v391
        %v422 = vpack.c.b16 %v394, %v393
        %v423 = vpack.c.b16 %v396, %v395
        %v424 = vpack.c.b16 %v398, %v397
        %v425 = vpack.c.b16 %v400, %v399
        %v426 = vpack.c.b16 %v402, %v401
        %v427 = vpack.c.b16 %v404, %v403
        %v428 = vpack.c.b16 %v406, %v405
        %v429 = vpack.c.b16 %v408, %v407
        %v430 = vpack.c.b16 %v410, %v409
        %v431 = vpack.c.b16 %v412, %v411
        %v432 = vpack.c.b16 %v414, %v413
        %v433 = vpack.c.b16 %v416, %v415
        %v434 = vpack.c.b16 %v418, %v417
        %451 = vmatprep.subr.bf16.mxu0 0
        %452 = vmatpush1.bf16.msra.mxu0 %v419
        %453 = vmatprep.subr.bf16.mxu0 0
        %454 = vmatpush1.bf16.msra.mxu0 %v420
        %455 = vmatprep.subr.bf16.mxu0 0
        %456 = vmatpush1.bf16.msra.mxu0 %v421
        %457 = vmatprep.subr.bf16.mxu0 0
        %458 = vmatpush1.bf16.msra.mxu0 %v422
        %459 = vmatprep.subr.bf16.mxu0 0
        %460 = vmatpush1.bf16.msra.mxu0 %v423
        %461 = vmatprep.subr.bf16.mxu0 0
        %462 = vmatpush1.bf16.msra.mxu0 %v424
        %463 = vmatprep.subr.bf16.mxu0 0
        %464 = vmatpush1.bf16.msra.mxu0 %v425
        %465 = vmatprep.subr.bf16.mxu0 0
        %466 = vmatpush1.bf16.msra.mxu0 %v426
        %467 = vmatprep.subr.bf16.mxu0 0
        %468 = vmatpush1.bf16.msra.mxu0 %v427
        %469 = vmatprep.subr.bf16.mxu0 0
        %470 = vmatpush1.bf16.msra.mxu0 %v428
        %471 = vmatprep.subr.bf16.mxu0 0
        %472 = vmatpush1.bf16.msra.mxu0 %v429
        %473 = vmatprep.subr.bf16.mxu0 0
        %474 = vmatpush1.bf16.msra.mxu0 %v430
        %475 = vmatprep.subr.bf16.mxu0 0
        %476 = vmatpush1.bf16.msra.mxu0 %v431
        %477 = vmatprep.subr.bf16.mxu0 0
        %478 = vmatpush1.bf16.msra.mxu0 %v432
        %479 = vmatprep.subr.bf16.mxu0 0
        %480 = vmatpush1.bf16.msra.mxu0 %v433
        %481 = vmatprep.subr.bf16.mxu0 0
        %482 = vmatpush1.bf16.msra.mxu0 %v434
        %483 = vmatprep.mubr.bf16.mxu0 %v303
        %484 = vmatmul.mubr.bf16.gmra.mrb[0].mxu0 %v302
        %v485 = vpop.f32.mrb[0].mxu0
        %v486 = vadd.f32 %v353, %v485
        %v487 = vpop.f32.mrb[0].mxu0
        %v488 = vpop.f32.mrb[0].mxu0
        %v489 = vadd.f32 %v353, %v488
        %v490 = vpop.f32.mrb[0].mxu0
        %491 = vmatprep.mubr.bf16.mxu0 %v305
        %492 = vmatmul.mubr.bf16.gmra.mrb[0].mxu0 %v304
        %v493 = vpop.f32.mrb[0].mxu0
        %v494 = vadd.f32 %v353, %v493
        %v495 = vpop.f32.mrb[0].mxu0
        %v496 = vpop.f32.mrb[0].mxu0
        %v497 = vadd.f32 %v353, %v496
        %v498 = vpop.f32.mrb[0].mxu0
        %499 = vmatprep.mubr.bf16.mxu0 %v307
        %500 = vmatmul.mubr.bf16.gmra.mrb[0].mxu0 %v306
        %v501 = vpop.f32.mrb[0].mxu0
        %v502 = vadd.f32 %v353, %v501
        %v503 = vpop.f32.mrb[0].mxu0
        %v504 = vpop.f32.mrb[0].mxu0
        %v505 = vadd.f32 %v353, %v504
        %v506 = vpop.f32.mrb[0].mxu0
        %507 = vmatprep.mubr.bf16.mxu0 %v309
        %508 = vmatmul.mubr.bf16.gmra.mrb[0].mxu0 %v308
        %v509 = vpop.f32.mrb[0].mxu0
        %v510 = vadd.f32 %v353, %v509
        %v511 = vpop.f32.mrb[0].mxu0
        %v512 = vpop.f32.mrb[0].mxu0
        %v513 = vadd.f32 %v353, %v512
        %v514 = vpop.f32.mrb[0].mxu0
        %515 = vmatprep.mubr.bf16.mxu0 %v311
        %516 = vmatmul.mubr.bf16.gmra.mrb[0].mxu0 %v310
        %v517 = vpop.f32.mrb[0].mxu0
        %v518 = vadd.f32 %v353, %v517
        %v519 = vpop.f32.mrb[0].mxu0
        %v520 = vpop.f32.mrb[0].mxu0
        %v521 = vadd.f32 %v353, %v520
        %v522 = vpop.f32.mrb[0].mxu0
        %523 = vmatprep.mubr.bf16.mxu0 %v313
        %524 = vmatmul.mubr.bf16.gmra.mrb[0].mxu0 %v312
        %v525 = vpop.f32.mrb[0].mxu0
        %v526 = vadd.f32 %v353, %v525
        %v527 = vpop.f32.mrb[0].mxu0
        %v528 = vpop.f32.mrb[0].mxu0
        %v529 = vadd.f32 %v353, %v528
        %v530 = vpop.f32.mrb[0].mxu0
        %531 = vmatprep.mubr.bf16.mxu0 %v315
        %532 = vmatmul.mubr.bf16.gmra.mrb[0].mxu0 %v314
        %v533 = vpop.f32.mrb[0].mxu0
        %v534 = vadd.f32 %v353, %v533
        %v535 = vpop.f32.mrb[0].mxu0
        %v536 = vpop.f32.mrb[0].mxu0
        %v537 = vpop.f32.mrb[0].mxu0
        %538 = vdwg.mxu0
        %v539 = vmax.f32 %v486, 0.0
        %v540 = vmax.f32 %v489, 0.0
        %v541 = vmax.f32 %v494, 0.0
        %v542 = vmax.f32 %v497, 0.0
        %v543 = vmax.f32 %v502, 0.0
        %v544 = vmax.f32 %v505, 0.0
        %v545 = vmax.f32 %v510, 0.0
        %v546 = vmax.f32 %v513, 0.0
        %v547 = vmax.f32 %v518, 0.0
        %v548 = vmax.f32 %v521, 0.0
        %v549 = vmax.f32 %v526, 0.0
        %v550 = vmax.f32 %v529, 0.0
        %v551 = vmax.f32 %v534, 0.0
        %v552 = vpack.c.bf16 %v540, %v539
        %v553 = vpack.c.bf16 %v542, %v541
        %v554 = vpack.c.bf16 %v544, %v543
        %v555 = vpack.c.bf16 %v546, %v545
        %v556 = vpack.c.bf16 %v548, %v547
        %v557 = vpack.c.bf16 %v550, %v549
        %v558 = vpack.c.bf16 %v551, %v551
        %v559 = vld [vmem:[#allocation7] sm:$0xff]
        %v560 = vld [vmem:[#allocation7 + $0x8] sm:$0xff]
        %v561 = vld [vmem:[#allocation7 + $0x10] sm:$0xff]
        %v562 = vld [vmem:[#allocation7 + $0x18] sm:$0xff]
        %v563 = vld [vmem:[#allocation7 + $0x20] sm:$0xff]
        %v564 = vld [vmem:[#allocation7 + $0x28] sm:$0xff]
        %v565 = vld [vmem:[#allocation7 + $0x30] sm:$0xff]
        %v566 = vld [vmem:[#allocation7 + $0x38] sm:$0xff]
        %v567 = vld [vmem:[#allocation7 + $0x40] sm:$0xff]
        %v568 = vld [vmem:[#allocation7 + $0x48] sm:$0xff]
        %v569 = vld [vmem:[#allocation7 + $0x50] sm:$0xff]
        %v570 = vld [vmem:[#allocation7 + $0x58] sm:$0xff]
        %v571 = vld [vmem:[#allocation7 + $0x60] sm:$0xff]
        %v572 = vld [vmem:[#allocation7 + $0x68] sm:$0xff]
        %v573 = vld [vmem:[#allocation7 + $0x70] sm:$0xff]
        %v574 = vld [vmem:[#allocation7 + $0x78] sm:$0xff]
        %v575 = vld [vmem:[%s4] sm:$0x3]
        %v577 = vlaneseq
        %v578 = vshrl.u32 %v577, 7
        %v579 = vsub.s32 0, %v578
        %v580 = vrot.slane %v575, %v579
        %v581 = vlaneseq
        %v582 = vshrl.u32 %v581, 7
        %v583 = vsub.s32 1, %v582
        %v584 = vrot.slane %v575, %v583
        %v603 = vunpack.c.l.b16 %v559
        %v604 = vunpack.c.h.b16 %v559
        %v605 = vunpack.c.l.b16 %v560
        %v606 = vunpack.c.h.b16 %v560
        %v607 = vunpack.c.l.b16 %v561
        %v608 = vunpack.c.h.b16 %v561
        %v609 = vunpack.c.l.b16 %v562
        %v610 = vunpack.c.h.b16 %v562
        %v611 = vunpack.c.l.b16 %v563
        %v612 = vunpack.c.h.b16 %v563
        %v613 = vunpack.c.l.b16 %v564
        %v614 = vunpack.c.h.b16 %v564
        %v615 = vunpack.c.l.b16 %v565
        %v616 = vunpack.c.h.b16 %v565
        %v617 = vunpack.c.l.b16 %v566
        %v618 = vunpack.c.h.b16 %v566
        %v619 = vunpack.c.l.b16 %v567
        %v620 = vunpack.c.h.b16 %v567
        %v621 = vunpack.c.l.b16 %v568
        %v622 = vunpack.c.h.b16 %v568
        %v623 = vunpack.c.l.b16 %v569
        %v624 = vunpack.c.h.b16 %v569
        %v625 = vunpack.c.l.b16 %v570
        %v626 = vunpack.c.h.b16 %v570
        %v627 = vunpack.c.l.b16 %v571
        %v628 = vunpack.c.h.b16 %v571
        %v629 = vunpack.c.l.b16 %v572
        %v630 = vunpack.c.h.b16 %v572
        %v631 = vunpack.c.l.b16 %v573
        %v632 = vunpack.c.h.b16 %v573
        %v633 = vunpack.c.l.b16 %v574
        %v634 = vunpack.c.h.b16 %v574
        %v635 = vpack.c.b16 %v605, %v603
        %v636 = vpack.c.b16 %v606, %v604
        %v637 = vpack.c.b16 %v609, %v607
        %v638 = vpack.c.b16 %v610, %v608
        %v639 = vpack.c.b16 %v613, %v611
        %v640 = vpack.c.b16 %v614, %v612
        %v641 = vpack.c.b16 %v617, %v615
        %v642 = vpack.c.b16 %v618, %v616
        %v643 = vpack.c.b16 %v621, %v619
        %v644 = vpack.c.b16 %v622, %v620
        %v645 = vpack.c.b16 %v625, %v623
        %v646 = vpack.c.b16 %v626, %v624
        %v647 = vpack.c.b16 %v629, %v627
        %v648 = vpack.c.b16 %v630, %v628
        %v649 = vpack.c.b16 %v633, %v631
        %v650 = vpack.c.b16 %v634, %v632
        %667 = vmatprep.subr.bf16.mxu0 %v636
        %668 = vmatpush1.bf16.msra.mxu0 %v635
        %669 = vmatprep.subr.bf16.mxu0 %v638
        %670 = vmatpush1.bf16.msra.mxu0 %v637
        %671 = vmatprep.subr.bf16.mxu0 %v640
        %672 = vmatpush1.bf16.msra.mxu0 %v639
        %673 = vmatprep.subr.bf16.mxu0 %v642
        %674 = vmatpush1.bf16.msra.mxu0 %v641
        %675 = vmatprep.subr.bf16.mxu0 %v644
        %676 = vmatpush1.bf16.msra.mxu0 %v643
        %677 = vmatprep.subr.bf16.mxu0 %v646
        %678 = vmatpush1.bf16.msra.mxu0 %v645
        %679 = vmatprep.subr.bf16.mxu0 %v648
        %680 = vmatpush1.bf16.msra.mxu0 %v647
        %681 = vmatprep.subr.bf16.mxu0 %v650
        %682 = vmatpush1.bf16.msra.mxu0 %v649
        %683 = vmatprep.subr.bf16.mxu0 0
        %684 = vmatpush1.bf16.msra.mxu0 0
        %685 = vmatprep.subr.bf16.mxu0 0
        %686 = vmatpush1.bf16.msra.mxu0 0
        %687 = vmatprep.subr.bf16.mxu0 0
        %688 = vmatpush1.bf16.msra.mxu0 0
        %689 = vmatprep.subr.bf16.mxu0 0
        %690 = vmatpush1.bf16.msra.mxu0 0
        %691 = vmatprep.subr.bf16.mxu0 0
        %692 = vmatpush1.bf16.msra.mxu0 0
        %693 = vmatprep.subr.bf16.mxu0 0
        %694 = vmatpush1.bf16.msra.mxu0 0
        %695 = vmatprep.subr.bf16.mxu0 0
        %696 = vmatpush1.bf16.msra.mxu0 0
        %697 = vmatprep.subr.bf16.mxu0 0
        %698 = vmatpush1.bf16.msra.mxu0 0
        %699 = vmatprep.mubr.bf16.mxu0 0
        %700 = vmatmul.mubr.bf16.gmra.mrb[0].mxu0 %v552
        %v701 = vpop.f32.mrb[0].mxu0
        %v702 = vadd.f32 %v580, %v701
        %v703 = vpop.f32.mrb[0].mxu0
        %v704 = vadd.f32 %v584, %v703
        %v705 = vpop.f32.mrb[0].mxu0
        %v706 = vadd.f32 %v580, %v705
        %v707 = vpop.f32.mrb[0].mxu0
        %v708 = vadd.f32 %v584, %v707
        %709 = vmatprep.mubr.bf16.mxu0 0
        %710 = vmatmul.mubr.bf16.gmra.mrb[0].mxu0 %v553
        %v711 = vpop.f32.mrb[0].mxu0
        %v712 = vadd.f32 %v580, %v711
        %v713 = vpop.f32.mrb[0].mxu0
        %v714 = vadd.f32 %v584, %v713
        %v715 = vpop.f32.mrb[0].mxu0
        %v716 = vadd.f32 %v580, %v715
        %v717 = vpop.f32.mrb[0].mxu0
        %v718 = vadd.f32 %v584, %v717
        %719 = vmatprep.mubr.bf16.mxu0 0
        %720 = vmatmul.mubr.bf16.gmra.mrb[0].mxu0 %v554
        %v721 = vpop.f32.mrb[0].mxu0
        %v722 = vadd.f32 %v580, %v721
        %v723 = vpop.f32.mrb[0].mxu0
        %v724 = vadd.f32 %v584, %v723
        %v725 = vpop.f32.mrb[0].mxu0
        %v726 = vadd.f32 %v580, %v725
        %v727 = vpop.f32.mrb[0].mxu0
        %v728 = vadd.f32 %v584, %v727
        %729 = vmatprep.mubr.bf16.mxu0 0
        %730 = vmatmul.mubr.bf16.gmra.mrb[0].mxu0 %v555
        %v731 = vpop.f32.mrb[0].mxu0
        %v732 = vadd.f32 %v580, %v731
        %v733 = vpop.f32.mrb[0].mxu0
        %v734 = vadd.f32 %v584, %v733
        %v735 = vpop.f32.mrb[0].mxu0
        %v736 = vadd.f32 %v580, %v735
        %v737 = vpop.f32.mrb[0].mxu0
        %v738 = vadd.f32 %v584, %v737
        %739 = vmatprep.mubr.bf16.mxu0 0
        %740 = vmatmul.mubr.bf16.gmra.mrb[0].mxu0 %v556
        %v741 = vpop.f32.mrb[0].mxu0
        %v742 = vadd.f32 %v580, %v741
        %v743 = vpop.f32.mrb[0].mxu0
        %v744 = vadd.f32 %v584, %v743
        %v745 = vpop.f32.mrb[0].mxu0
        %v746 = vadd.f32 %v580, %v745
        %v747 = vpop.f32.mrb[0].mxu0
        %v748 = vadd.f32 %v584, %v747
        %749 = vmatprep.mubr.bf16.mxu0 0
        %750 = vmatmul.mubr.bf16.gmra.mrb[0].mxu0 %v557
        %v751 = vpop.f32.mrb[0].mxu0
        %v752 = vadd.f32 %v580, %v751
        %v753 = vpop.f32.mrb[0].mxu0
        %v754 = vadd.f32 %v584, %v753
        %v755 = vpop.f32.mrb[0].mxu0
        %v756 = vadd.f32 %v580, %v755
        %v757 = vpop.f32.mrb[0].mxu0
        %v758 = vadd.f32 %v584, %v757
        %759 = vmatprep.mubr.bf16.mxu0 0
        %760 = vmatmul.mubr.bf16.gmra.mrb[0].mxu0 %v558
        %v761 = vpop.f32.mrb[0].mxu0
        %v762 = vadd.f32 %v580, %v761
        %v763 = vpop.f32.mrb[0].mxu0
        %v764 = vadd.f32 %v584, %v763
        %v765 = vpop.f32.mrb[0].mxu0
        %v766 = vpop.f32.mrb[0].mxu0
        %767 = vdwg.mxu0
        %v768 = vmax.f32 %v702, %v704
        %769 = vmax.xlane.f32.xlu0 %v768
        %v770 = vpop.xlane.xlu0 %769
        %v771 = vmax.f32 %v706, %v708
        %772 = vmax.xlane.f32.xlu0 %v771
        %v773 = vpop.xlane.xlu0 %772
        %v774 = vmax.f32 %v712, %v714
        %775 = vmax.xlane.f32.xlu0 %v774
        %v776 = vpop.xlane.xlu0 %775
        %v777 = vmax.f32 %v716, %v718
        %778 = vmax.xlane.f32.xlu0 %v777
        %v779 = vpop.xlane.xlu0 %778
        %v780 = vmax.f32 %v722, %v724
        %781 = vmax.xlane.f32.xlu0 %v780
        %v782 = vpop.xlane.xlu0 %781
        %v783 = vmax.f32 %v726, %v728
        %784 = vmax.xlane.f32.xlu0 %v783
        %v785 = vpop.xlane.xlu0 %784
        %v786 = vmax.f32 %v732, %v734
        %787 = vmax.xlane.f32.xlu0 %v786
        %v788 = vpop.xlane.xlu0 %787
        %v789 = vmax.f32 %v736, %v738
        %790 = vmax.xlane.f32.xlu0 %v789
        %v791 = vpop.xlane.xlu0 %790
        %v792 = vmax.f32 %v742, %v744
        %793 = vmax.xlane.f32.xlu0 %v792
        %v794 = vpop.xlane.xlu0 %793
        %v795 = vmax.f32 %v746, %v748
        %796 = vmax.xlane.f32.xlu0 %v795
        %v797 = vpop.xlane.xlu0 %796
        %v798 = vmax.f32 %v752, %v754
        %799 = vmax.xlane.f32.xlu0 %v798
        %v800 = vpop.xlane.xlu0 %799
        %v801 = vmax.f32 %v756, %v758
        %802 = vmax.xlane.f32.xlu0 %v801
        %v803 = vpop.xlane.xlu0 %802
        %v804 = vmax.f32 %v762, %v764
        %805 = vmax.xlane.f32.xlu0 %v804
        %v806 = vpop.xlane.xlu0 %805
        %v807 = vsub.f32 %v702, %v770
        %v808 = vsub.f32 %v704, %v770
        %v809 = vsub.f32 %v706, %v773
        %v810 = vsub.f32 %v708, %v773
        %v811 = vsub.f32 %v712, %v776
        %v812 = vsub.f32 %v714, %v776
        %v813 = vsub.f32 %v716, %v779
        %v814 = vsub.f32 %v718, %v779
        %v815 = vsub.f32 %v722, %v782
        %v816 = vsub.f32 %v724, %v782
        %v817 = vsub.f32 %v726, %v785
        %v818 = vsub.f32 %v728, %v785
        %v819 = vsub.f32 %v732, %v788
        %v820 = vsub.f32 %v734, %v788
        %v821 = vsub.f32 %v736, %v791
        %v822 = vsub.f32 %v738, %v791
        %v823 = vsub.f32 %v742, %v794
        %v824 = vsub.f32 %v744, %v794
        %v825 = vsub.f32 %v746, %v797
        %v826 = vsub.f32 %v748, %v797
        %v827 = vsub.f32 %v752, %v800
        %v828 = vsub.f32 %v754, %v800
        %v829 = vsub.f32 %v756, %v803
        %v830 = vsub.f32 %v758, %v803
        %v831 = vsub.f32 %v762, %v806
        %v832 = vsub.f32 %v764, %v806
        %v833 = vmul.f32 %v807, 1.442695
        %v834 = vpow.pop %v833
        %v835 = vmul.f32 %v808, 1.442695
        %v836 = vpow.pop %v835
        %v837 = vmul.f32 %v809, 1.442695
        %v838 = vpow.pop %v837
        %v839 = vmul.f32 %v810, 1.442695
        %v840 = vpow.pop %v839
        %v841 = vmul.f32 %v811, 1.442695
        %v842 = vpow.pop %v841
        %v843 = vmul.f32 %v812, 1.442695
        %v844 = vpow.pop %v843
        %v845 = vmul.f32 %v813, 1.442695
        %v846 = vpow.pop %v845
        %v847 = vmul.f32 %v814, 1.442695
        %v848 = vpow.pop %v847
        %v849 = vmul.f32 %v815, 1.442695
        %v850 = vpow.pop %v849
        %v851 = vmul.f32 %v816, 1.442695
        %v852 = vpow.pop %v851
        %v853 = vmul.f32 %v817, 1.442695
        %v854 = vpow.pop %v853
        %v855 = vmul.f32 %v818, 1.442695
        %v856 = vpow.pop %v855
        %v857 = vmul.f32 %v819, 1.442695
        %v858 = vpow.pop %v857
        %v859 = vmul.f32 %v820, 1.442695
        %v860 = vpow.pop %v859
        %v861 = vmul.f32 %v821, 1.442695
        %v862 = vpow.pop %v861
        %v863 = vmul.f32 %v822, 1.442695
        %v864 = vpow.pop %v863
        %v865 = vmul.f32 %v823, 1.442695
        %v866 = vpow.pop %v865
        %v867 = vmul.f32 %v824, 1.442695
        %v868 = vpow.pop %v867
        %v869 = vmul.f32 %v825, 1.442695
        %v870 = vpow.pop %v869
        %v871 = vmul.f32 %v826, 1.442695
        %v872 = vpow.pop %v871
        %v873 = vmul.f32 %v827, 1.442695
        %v874 = vpow.pop %v873
        %v875 = vmul.f32 %v828, 1.442695
        %v876 = vpow.pop %v875
        %v877 = vmul.f32 %v829, 1.442695
        %v878 = vpow.pop %v877
        %v879 = vmul.f32 %v830, 1.442695
        %v880 = vpow.pop %v879
        %v881 = vmul.f32 %v831, 1.442695
        %v882 = vpow.pop %v881
        %v883 = vmul.f32 %v832, 1.442695
        %v884 = vpow.pop %v883
        %v885 = vadd.f32 %v834, %v836
        %886 = vadd.xlane.f32.xlu0 %v885
        %v887 = vpop.xlane.xlu0 %886
        %v888 = vadd.f32 %v838, %v840
        %889 = vadd.xlane.f32.xlu0 %v888
        %v890 = vpop.xlane.xlu0 %889
        %v891 = vadd.f32 %v842, %v844
        %892 = vadd.xlane.f32.xlu0 %v891
        %v893 = vpop.xlane.xlu0 %892
        %v894 = vadd.f32 %v846, %v848
        %895 = vadd.xlane.f32.xlu0 %v894
        %v896 = vpop.xlane.xlu0 %895
        %v897 = vadd.f32 %v850, %v852
        %898 = vadd.xlane.f32.xlu0 %v897
        %v899 = vpop.xlane.xlu0 %898
        %v900 = vadd.f32 %v854, %v856
        %901 = vadd.xlane.f32.xlu0 %v900
        %v902 = vpop.xlane.xlu0 %901
        %v903 = vadd.f32 %v858, %v860
        %904 = vadd.xlane.f32.xlu0 %v903
        %v905 = vpop.xlane.xlu0 %904
        %v906 = vadd.f32 %v862, %v864
        %907 = vadd.xlane.f32.xlu0 %v906
        %v908 = vpop.xlane.xlu0 %907
        %v909 = vadd.f32 %v866, %v868
        %910 = vadd.xlane.f32.xlu0 %v909
        %v911 = vpop.xlane.xlu0 %910
        %v912 = vadd.f32 %v870, %v872
        %913 = vadd.xlane.f32.xlu0 %v912
        %v914 = vpop.xlane.xlu0 %913
        %v915 = vadd.f32 %v874, %v876
        %916 = vadd.xlane.f32.xlu0 %v915
        %v917 = vpop.xlane.xlu0 %916
        %v918 = vadd.f32 %v878, %v880
        %919 = vadd.xlane.f32.xlu0 %v918
        %v920 = vpop.xlane.xlu0 %919
        %v921 = vadd.f32 %v882, %v884
        %922 = vadd.xlane.f32.xlu0 %v921
        %v923 = vpop.xlane.xlu0 %922
        %v924 = vrcp.pop %v887
        %v925 = vmul.f32 %v834, %v924
        %v926 = vmul.f32 %v836, %v924
        %v927 = vrcp.pop %v890
        %v928 = vmul.f32 %v838, %v927
        %v929 = vmul.f32 %v840, %v927
        %v930 = vrcp.pop %v893
        %v931 = vmul.f32 %v842, %v930
        %v932 = vmul.f32 %v844, %v930
        %v933 = vrcp.pop %v896
        %v934 = vmul.f32 %v846, %v933
        %v935 = vmul.f32 %v848, %v933
        %v936 = vrcp.pop %v899
        %v937 = vmul.f32 %v850, %v936
        %v938 = vmul.f32 %v852, %v936
        %v939 = vrcp.pop %v902
        %v940 = vmul.f32 %v854, %v939
        %v941 = vmul.f32 %v856, %v939
        %v942 = vrcp.pop %v905
        %v943 = vmul.f32 %v858, %v942
        %v944 = vmul.f32 %v860, %v942
        %v945 = vrcp.pop %v908
        %v946 = vmul.f32 %v862, %v945
        %v947 = vmul.f32 %v864, %v945
        %v948 = vrcp.pop %v911
        %v949 = vmul.f32 %v866, %v948
        %v950 = vmul.f32 %v868, %v948
        %v951 = vrcp.pop %v914
        %v952 = vmul.f32 %v870, %v951
        %v953 = vmul.f32 %v872, %v951
        %v954 = vrcp.pop %v917
        %v955 = vmul.f32 %v874, %v954
        %v956 = vmul.f32 %v876, %v954
        %v957 = vrcp.pop %v920
        %v958 = vmul.f32 %v878, %v957
        %v959 = vmul.f32 %v880, %v957
        %v960 = vrcp.pop %v923
        %v961 = vmul.f32 %v882, %v960
        %v962 = vmul.f32 %v884, %v960
        %963 = vst [vmem:[%s272] sm:$0xff] %v925
        %964 = vst [vmem:[%s272 + $0x8] sm:$0xff] %v926
        %965 = vst [vmem:[%s272 + $0x10] sm:$0xff] %v928
        %966 = vst [vmem:[%s272 + $0x18] sm:$0xff] %v929
        %967 = vst [vmem:[%s272 + $0x20] sm:$0xff] %v931
        %968 = vst [vmem:[%s272 + $0x28] sm:$0xff] %v932
        %969 = vst [vmem:[%s272 + $0x30] sm:$0xff] %v934
        %970 = vst [vmem:[%s272 + $0x38] sm:$0xff] %v935
        %971 = vst [vmem:[%s272 + $0x40] sm:$0xff] %v937
        %972 = vst [vmem:[%s272 + $0x48] sm:$0xff] %v938
        %973 = vst [vmem:[%s272 + $0x50] sm:$0xff] %v940
        %974 = vst [vmem:[%s272 + $0x58] sm:$0xff] %v941
        %975 = vst [vmem:[%s272 + $0x60] sm:$0xff] %v943
        %976 = vst [vmem:[%s272 + $0x68] sm:$0xff] %v944
        %977 = vst [vmem:[%s272 + $0x70] sm:$0xff] %v946
        %978 = vst [vmem:[%s272 + $0x78] sm:$0xff] %v947
        %979 = vst [vmem:[%s272 + $0x80] sm:$0xff] %v949
        %980 = vst [vmem:[%s272 + $0x88] sm:$0xff] %v950
        %981 = vst [vmem:[%s272 + $0x90] sm:$0xff] %v952
        %982 = vst [vmem:[%s272 + $0x98] sm:$0xff] %v953
        %983 = vst [vmem:[%s272 + $0xa0] sm:$0xff] %v955
        %984 = vst [vmem:[%s272 + $0xa8] sm:$0xff] %v956
        %985 = vst [vmem:[%s272 + $0xb0] sm:$0xff] %v958
        %986 = vst [vmem:[%s272 + $0xb8] sm:$0xff] %v959
        %987 = vst [vmem:[%s272 + $0xc0] sm:$0xff] %v961
        %988 = vst [vmem:[%s272 + $0xc8] sm:$0xff] %v962
        %s989 = sand.u32 %s141, 1
        %s990 = scalar_lea.sflag [#allocation4], %s989
        %s991 = sand.u32 %s141, 1
        %s992 = smul.addr %s991, 208
        %s993 = scalar_lea.vmem [#allocation8], %s992
        // Predicated region
        $region53: #{tpu_custom_call.1} parent=39 // pred_check
          %p994 = pneg %p151
        $region54: #{tpu_custom_call.1} parent=39 // pred_check_branch
          %996 = sbr.rel (%p994) target = $region56
        $region55: #{tpu_custom_call.1} parent=39 // pred_region
          %s997 = smul.u32 13, %s23
          %s999 = ssub.s32 3328, 3328
          %1000 = vsyncadd %s990, %s999
          %s1001 = smul.addr %s997, 2
          %s1002 = smul.addr %s1001, 128
          %s1003 = scalar_lea.hbm %s5, %s1002
          %s1004 = sshll.u32 %s993, 4
          %s1005 = int_to_ptr.vmem [resolvable:$true] %s1004
          %1010 = dma.vmem_to_hbm [thread:$0]  %s1005, 3328, %s1003, %s990, 256, 256, 16
        $region56: #{tpu_custom_call.1} parent=39 // pred_fallthru
          _
      $region40: #{tpu_custom_call.1} parent=5 // pred_fallthru
        _
      %p1011 = scmp.le.s32.totalorder 2, %s18
      // Predicated region
      $region57: #{tpu_custom_call.1} parent=5 // pred_check
        %p1012 = pneg %p1011
      $region58: #{tpu_custom_call.1} parent=5 // pred_check_branch
        %1014 = sbr.rel (%p1012) target = $region60
      $region59: #{tpu_custom_call.1} parent=5 // pred_region
        %s1015 = ssub.s32 %s18, 2
        // Predicated region
        $region61: #{tpu_custom_call.1} parent=59 // pred_check
          %p1016 = pneg %p157
        $region62: #{tpu_custom_call.1} parent=59 // pred_check_branch
          %1018 = sbr.rel (%p1016) target = $region64
        $region63: #{tpu_custom_call.1} parent=59 // pred_region
          %s1019 = sand.u32 %s142, 1
          %s1020 = scalar_lea.sflag [#allocation4], %s1019
          %s1021 = sand.u32 %s142, 1
          %s1022 = smul.addr %s1021, 208
          %s1023 = scalar_lea.vmem [#allocation8], %s1022
          %1024 = dma.done %s1020, 3328
        $region64: #{tpu_custom_call.1} parent=59 // pred_fallthru
          _
      $region60: #{tpu_custom_call.1} parent=5 // pred_fallthru
        _
    $region6: #{tpu_custom_call.1} parent=1 // loop_footer
      %s22 = sadd.s32 1, %s18
    $region7: #{tpu_custom_call.1} parent=1 // loop_footer_branch
      %17 = sbr.rel target = $region3
    $region8: #{tpu_custom_call.1} parent=1 // loop_exit
      _
    %1025 = vsyncpa [#allocation3], 1
    %s1026 = scalar_lea.sflag [#allocation3], 1
    %1027 = vsyncpa %s1026, 1
    %1028 = vsyncpa [#allocation6], 1
    %1029 = vsyncpa [#allocation4], 1
    %s1030 = scalar_lea.sflag [#allocation4], 1
    %1031 = vsyncpa %s1030, 1

</llo_original>
